<compile_context>
chip_gen: v5e
topology: v5e:2x2
jax: 0.10.0
libtpu: 0.0.40
codegen_flags: <defaults>
</compile_context>

<pallas_src>
import math

import jax
import jax.numpy as jnp
from jax.experimental import pallas as pl
from jax.experimental.pallas import tpu as pltpu


def _round_up(x: int, m: int) -> int:
    return (x + m - 1) // m * m


def _timestep_embedder_kernel(t_ref, freqs_ref, w1c_ref, w1s_ref, b1_ref,
                              w2_ref, b2_ref, o_ref, h_ref):
    # Grid: (i = batch tiles [parallel], j = hidden-column tiles [arbitrary]).
    # t_ref:     (TN, 1)            f32
    # freqs_ref: (1, half_pad)      f32
    # w1c_ref:   (half_pad, H_pad)  bf16  (cos half of w1, resident)
    # w1s_ref:   (half_pad, H_pad)  bf16  (sin half of w1, resident)
    # b1_ref:    (1, H_pad)         f32
    # w2_ref:    (H_pad, TH)        bf16  (column tile j of w2)
    # b2_ref:    (1, TH)            f32
    # o_ref:     (TN, TH)           f32
    # h_ref:     (TN, H_pad)        bf16 VMEM scratch: SiLU(emb @ w1 + b1)

    @pl.when(pl.program_id(1) == 0)
    def _compute_hidden():
        args = t_ref[...] * freqs_ref[...]                  # (TN, half_pad) f32
        cos_e = jnp.cos(args).astype(jnp.bfloat16)
        sin_e = jnp.sin(args).astype(jnp.bfloat16)
        # Split first matmul: avoids materializing concat([cos, sin], -1).
        h = jnp.dot(cos_e, w1c_ref[...], preferred_element_type=jnp.float32)
        h = h + jnp.dot(sin_e, w1s_ref[...], preferred_element_type=jnp.float32)
        h = h + b1_ref[...]
        h = h * jax.nn.sigmoid(h)                           # SiLU in f32
        h_ref[...] = h.astype(jnp.bfloat16)

    out = jnp.dot(h_ref[...], w2_ref[...], preferred_element_type=jnp.float32)
    o_ref[...] = (out + b2_ref[...]).astype(o_ref.dtype)


def timestep_embedder_forward(t, w1, b1, w2, b2, *, frequency_embedding_size,
                              max_period=10000, block_n=256, block_h=512):
    """t: (N,) float. w1: (freq_dim, H), b1: (1,H)/(H,), w2: (H,H), b2: (1,H)/(H,).

    Returns (N, H) float32. Matmuls use bf16 inputs with f32 accumulation.
    """
    n = t.shape[0]
    hidden = w2.shape[1]
    dim = frequency_embedding_size
    half = dim // 2
    # NOTE: odd `dim` is supported: torch appends a zero column, whose matching
    # w1 row (index 2*half) multiplies zero and is therefore simply dropped.

    # ---- padded / tiled sizes (lane = 128, sublane = 8) --------------------
    half_pad = max(_round_up(half, 128), 128)
    h_pad = max(_round_up(hidden, 128), 128)
    # Largest multiple of 128 that divides h_pad and is <= block_h.
    k = h_pad // 128
    d_best = 1
    for d in range(1, k + 1):
        if k % d == 0 and d * 128 <= max(block_h, 128):
            d_best = d
    th = d_best * 128
    tn = min(_round_up(block_n, 8), _round_up(n, 8))
    n_pad = _round_up(n, tn)

    # ---- padded operands (zero padding is exact) ---------------------------
    t2d = jnp.zeros((n_pad, 1), jnp.float32).at[:n, 0].set(t.astype(jnp.float32))

    freqs = jnp.exp(-math.log(max_period) *
                    jnp.arange(half, dtype=jnp.float32) / max(half, 1))
    freqs_p = jnp.zeros((1, half_pad), jnp.float32).at[0, :half].set(freqs)

    w1f = w1.astype(jnp.float32)
    w1c = (jnp.zeros((half_pad, h_pad), jnp.float32)
           .at[:half, :hidden].set(w1f[:half]).astype(jnp.bfloat16))
    w1s = (jnp.zeros((half_pad, h_pad), jnp.float32)
           .at[:half, :hidden].set(w1f[half:2 * half]).astype(jnp.bfloat16))
    b1p = (jnp.zeros((1, h_pad), jnp.float32)
           .at[0, :hidden].set(b1.reshape(-1).astype(jnp.float32)))
    w2p = (jnp.zeros((h_pad, h_pad), jnp.float32)
           .at[:hidden, :hidden].set(w2.astype(jnp.float32)).astype(jnp.bfloat16))
    b2p = (jnp.zeros((1, h_pad), jnp.float32)
           .at[0, :hidden].set(b2.reshape(-1).astype(jnp.float32)))

    grid = (n_pad // tn, h_pad // th)

    in_specs = [
        pl.BlockSpec((tn, 1), lambda i, j: (i, 0)),            # t
        pl.BlockSpec((1, half_pad), lambda i, j: (0, 0)),      # freqs (resident)
        pl.BlockSpec((half_pad, h_pad), lambda i, j: (0, 0)),  # w1 cos (resident)
        pl.BlockSpec((half_pad, h_pad), lambda i, j: (0, 0)),  # w1 sin (resident)
        pl.BlockSpec((1, h_pad), lambda i, j: (0, 0)),         # b1 (resident)
        pl.BlockSpec((h_pad, th), lambda i, j: (0, j)),        # w2 column tile
        pl.BlockSpec((1, th), lambda i, j: (0, j)),            # b2 tile
    ]
    out_specs = pl.BlockSpec((tn, th), lambda i, j: (i, j))

    # ---- VMEM budget & cost estimate ---------------------------------------
    vmem_bytes = (
        2 * tn * 4                      # t tiles (double-buffered)
        + half_pad * 4                  # freqs
        + 2 * half_pad * h_pad * 2      # w1 cos/sin (bf16, resident)
        + h_pad * 4                     # b1
        + 2 * h_pad * th * 2            # w2 column tiles (bf16, 2 bufs)
        + 2 * th * 4                    # b2 tiles
        + 2 * tn * th * 4               # out tiles (2 bufs)
        + tn * h_pad * 2                # SiLU hidden scratch (bf16)
    )
    vmem_limit = int(min(64 * 2**20, max(4 * 2**20, 2 * vmem_bytes)))

    flops = 2 * n_pad * (2 * half_pad * h_pad + h_pad * h_pad)
    transcendentals = n_pad * (2 * half_pad + h_pad)
    bytes_accessed = (t2d.nbytes + freqs_p.nbytes + w1c.nbytes + w1s.nbytes
                      + b1p.nbytes + w2p.nbytes + b2p.nbytes + n_pad * h_pad * 4)

    out = pl.pallas_call(
        _timestep_embedder_kernel,
        out_shape=jax.ShapeDtypeStruct((n_pad, h_pad), jnp.float32),
        grid_spec=pltpu.PrefetchScalarGridSpec(
            num_scalar_prefetch=0,
            grid=grid,
            in_specs=in_specs,
            out_specs=out_specs,
            scratch_shapes=[pltpu.VMEM((tn, h_pad), jnp.bfloat16)]),
        compiler_params=pltpu.CompilerParams(
            dimension_semantics=("parallel", "arbitrary"),
            vmem_limit_bytes=vmem_limit),
        cost_estimate=pl.CostEstimate(
            flops=flops, transcendentals=transcendentals,
            bytes_accessed=bytes_accessed),
    )(t2d, freqs_p, w1c, w1s, b1p, w2p, b2p)

    return out[:n, :hidden]


def _reference_forward_f32(t, w1, b1, w2, b2, frequency_embedding_size,
                           max_period=10000):
    """Pure-f32 JAX reference matching the PyTorch module semantics."""
    half = frequency_embedding_size // 2
    freqs = jnp.exp(
        -math.log(max_period) * jnp.arange(half, dtype=jnp.float32) / half)
    args = t.astype(jnp.float32)[:, None] * freqs[None]
    emb = jnp.concatenate([jnp.cos(args), jnp.sin(args)], axis=-1)
    h = emb @ w1 + b1
    h = h * jax.nn.sigmoid(h)
    return h @ w2 + b2


def _reference_forward_bf16(t, w1, b1, w2, b2, frequency_embedding_size,
                            max_period=10000):
    """Reference using the same bf16-input / f32-accumulation matmuls."""
    half = frequency_embedding_size // 2
    freqs = jnp.exp(
        -math.log(max_period) * jnp.arange(half, dtype=jnp.float32) / half)
    args = t.astype(jnp.float32)[:, None] * freqs[None]
    emb = jnp.concatenate([jnp.cos(args), jnp.sin(args)], axis=-1)
    h = jnp.dot(emb.astype(jnp.bfloat16), w1.astype(jnp.bfloat16),
                preferred_element_type=jnp.float32) + b1
    h = h * jax.nn.sigmoid(h)
    return jnp.dot(h.astype(jnp.bfloat16), w2.astype(jnp.bfloat16),
                   preferred_element_type=jnp.float32) + b2


if __name__ == "__main__":
    # Small, module-consistent shapes.
    batch = 8
    hidden_size = 32
    frequency_embedding_size = 256

    key = jax.random.PRNGKey(0)
    k_t, k_w1, k_b1, k_w2, k_b2 = jax.random.split(key, 5)

    # Timesteps (e.g. diffusion steps in [0, 1000)).
    t = jax.random.uniform(k_t, (batch,), dtype=jnp.float32, minval=0.0,
                           maxval=1000.0)

    # Parameters stored as (in, out), i.e. transpose of torch's (out, in), so
    # the kernel computes x @ W + b (== torch x @ W.T + b).
    w1 = jax.random.normal(k_w1, (frequency_embedding_size, hidden_size),
                           dtype=jnp.float32) * 0.02
    b1 = jax.random.normal(k_b1, (1, hidden_size), dtype=jnp.float32) * 0.02
    w2 = jax.random.normal(k_w2, (hidden_size, hidden_size),
                           dtype=jnp.float32) * 0.02
    b2 = jax.random.normal(k_b2, (1, hidden_size), dtype=jnp.float32) * 0.02

    out = timestep_embedder_forward(
        t, w1, b1, w2, b2,
        frequency_embedding_size=frequency_embedding_size)
    out = jax.block_until_ready(out)
    assert out.shape == (batch, hidden_size)

    # Tight check against a reference with the same bf16-in / f32-accum matmuls.
    ref_bf16 = _reference_forward_bf16(t, w1, b1, w2, b2,
                                       frequency_embedding_size)
    assert jnp.allclose(out, ref_bf16, atol=1e-4, rtol=1e-4), (
        float(jnp.max(jnp.abs(out - ref_bf16))))

    # Looser check against the pure-f32 PyTorch-semantics reference (bf16
    # weight/activation quantization bounds the difference).
    ref_f32 = _reference_forward_f32(t, w1, b1, w2, b2,
                                     frequency_embedding_size)
    assert jnp.allclose(out, ref_f32, atol=5e-3, rtol=5e-2), (
        float(jnp.max(jnp.abs(out - ref_f32))))

    print("KERNEL_OK")
</pallas_src>

<mosaic_0001>
module attributes {stable_mosaic.version = 11 : i64} {
  func.func @_timestep_embedder_kernel(%arg0: i32, %arg1: i32, %arg2: memref<8x1xf32, #tpu.memory_space<vmem>>, %arg3: memref<1x128xf32, #tpu.memory_space<vmem>>, %arg4: memref<128x128xbf16, #tpu.memory_space<vmem>>, %arg5: memref<128x128xbf16, #tpu.memory_space<vmem>>, %arg6: memref<1x128xf32, #tpu.memory_space<vmem>>, %arg7: memref<128x128xbf16, #tpu.memory_space<vmem>>, %arg8: memref<1x128xf32, #tpu.memory_space<vmem>>, %arg9: memref<8x128xf32, #tpu.memory_space<vmem>>, %arg10: memref<8x128xbf16, #tpu.memory_space<vmem>>) attributes {dimension_semantics = [#tpu.dimension_semantics<parallel>, #tpu.dimension_semantics<arbitrary>], iteration_bounds = array<i64: 1, 1>, scalar_prefetch = 0 : i64, scratch_operands = 1 : i64, tpu.core_type = #tpu.core_type<tc>, window_params = [{transform_indices = @transform_0, window_bounds = array<i64: 8, 1>}, {pipeline_mode = #tpu.pipeline_mode<synchronous>, transform_indices = @transform_1, window_bounds = array<i64: 1, 128>}, {pipeline_mode = #tpu.pipeline_mode<synchronous>, transform_indices = @transform_2, window_bounds = array<i64: 128, 128>}, {pipeline_mode = #tpu.pipeline_mode<synchronous>, transform_indices = @transform_3, window_bounds = array<i64: 128, 128>}, {pipeline_mode = #tpu.pipeline_mode<synchronous>, transform_indices = @transform_4, window_bounds = array<i64: 1, 128>}, {transform_indices = @transform_5, window_bounds = array<i64: 128, 128>}, {transform_indices = @transform_6, window_bounds = array<i64: 1, 128>}, {transform_indices = @transform_7, window_bounds = array<i64: 8, 128>}]} {
    %c0_i32 = arith.constant 0 : i32
    %0 = arith.cmpi eq, %arg1, %c0_i32 : i32
    %1 = arith.extui %0 : i1 to i32
    %c0_i32_0 = arith.constant 0 : i32
    %2 = arith.cmpi ne, %1, %c0_i32_0 : i32
    scf.if %2 {
      %c0_8 = arith.constant 0 : index
      %c0_9 = arith.constant 0 : index
      %10 = vector.load %arg2[%c0_8, %c0_9] : memref<8x1xf32, #tpu.memory_space<vmem>>, vector<8x1xf32>
      %c0_10 = arith.constant 0 : index
      %c0_11 = arith.constant 0 : index
      %11 = vector.load %arg3[%c0_10, %c0_11] : memref<1x128xf32, #tpu.memory_space<vmem>>, vector<1x128xf32>
      %12 = vector.broadcast %10 : vector<8x1xf32> to vector<8x128xf32>
      %13 = vector.broadcast %11 : vector<1x128xf32> to vector<8x128xf32>
      %14 = arith.mulf %12, %13 : vector<8x128xf32>
      %15 = math.cos %14 : vector<8x128xf32>
      %16 = arith.truncf %15 : vector<8x128xf32> to vector<8x128xbf16>
      %17 = math.sin %14 : vector<8x128xf32>
      %18 = arith.truncf %17 : vector<8x128xf32> to vector<8x128xbf16>
      %c0_12 = arith.constant 0 : index
      %c0_13 = arith.constant 0 : index
      %19 = vector.load %arg4[%c0_12, %c0_13] : memref<128x128xbf16, #tpu.memory_space<vmem>>, vector<128x128xbf16>
      %cst_14 = arith.constant dense<0.000000e+00> : vector<8x128xf32>
      %20 = tpu.matmul %16, %19, %cst_14 {dimension_numbers = #tpu.dot_dimension_numbers<[1], [0], [0], [1], [0, 0, 1, 1], [], []>} : vector<8x128xbf16>, vector<128x128xbf16>, vector<8x128xf32> -> vector<8x128xf32>
      %c0_15 = arith.constant 0 : index
      %c0_16 = arith.constant 0 : index
      %21 = vector.load %arg5[%c0_15, %c0_16] : memref<128x128xbf16, #tpu.memory_space<vmem>>, vector<128x128xbf16>
      %cst_17 = arith.constant dense<0.000000e+00> : vector<8x128xf32>
      %22 = tpu.matmul %18, %21, %cst_17 {dimension_numbers = #tpu.dot_dimension_numbers<[1], [0], [0], [1], [0, 0, 1, 1], [], []>} : vector<8x128xbf16>, vector<128x128xbf16>, vector<8x128xf32> -> vector<8x128xf32>
      %23 = arith.addf %20, %22 : vector<8x128xf32>
      %c0_18 = arith.constant 0 : index
      %c0_19 = arith.constant 0 : index
      %24 = vector.load %arg6[%c0_18, %c0_19] : memref<1x128xf32, #tpu.memory_space<vmem>>, vector<1x128xf32>
      %25 = vector.broadcast %24 : vector<1x128xf32> to vector<8x128xf32>
      %26 = arith.addf %23, %25 : vector<8x128xf32>
      %27 = arith.negf %26 : vector<8x128xf32>
      %28 = math.exp %27 : vector<8x128xf32>
      %cst_20 = arith.constant 1.000000e+00 : f32
      %29 = vector.broadcast %cst_20 : f32 to vector<8x128xf32>
      %30 = arith.addf %29, %28 : vector<8x128xf32>
      %31 = arith.divf %29, %30 : vector<8x128xf32>
      %32 = arith.mulf %26, %31 : vector<8x128xf32>
      %33 = arith.truncf %32 : vector<8x128xf32> to vector<8x128xbf16>
      %c0_21 = arith.constant 0 : index
      %c0_22 = arith.constant 0 : index
      %34 = vector.load %arg10[%c0_21, %c0_22] : memref<8x128xbf16, #tpu.memory_space<vmem>>, vector<8x128xbf16>
      tpu.vector_store %arg10[%c0_21, %c0_22], %33 {strides = array<i32>} : memref<8x128xbf16, #tpu.memory_space<vmem>>, vector<8x128xbf16>,
    } else {
    }
    %c0 = arith.constant 0 : index
    %c0_1 = arith.constant 0 : index
    %3 = vector.load %arg10[%c0, %c0_1] : memref<8x128xbf16, #tpu.memory_space<vmem>>, vector<8x128xbf16>
    %c0_2 = arith.constant 0 : index
    %c0_3 = arith.constant 0 : index
    %4 = vector.load %arg7[%c0_2, %c0_3] : memref<128x128xbf16, #tpu.memory_space<vmem>>, vector<128x128xbf16>
    %cst = arith.constant dense<0.000000e+00> : vector<8x128xf32>
    %5 = tpu.matmul %3, %4, %cst {dimension_numbers = #tpu.dot_dimension_numbers<[1], [0], [0], [1], [0, 0, 1, 1], [], []>} : vector<8x128xbf16>, vector<128x128xbf16>, vector<8x128xf32> -> vector<8x128xf32>
    %c0_4 = arith.constant 0 : index
    %c0_5 = arith.constant 0 : index
    %6 = vector.load %arg8[%c0_4, %c0_5] : memref<1x128xf32, #tpu.memory_space<vmem>>, vector<1x128xf32>
    %7 = vector.broadcast %6 : vector<1x128xf32> to vector<8x128xf32>
    %8 = arith.addf %5, %7 : vector<8x128xf32>
    %c0_6 = arith.constant 0 : index
    %c0_7 = arith.constant 0 : index
    %9 = vector.load %arg9[%c0_6, %c0_7] : memref<8x128xf32, #tpu.memory_space<vmem>>, vector<8x128xf32>
    tpu.vector_store %arg9[%c0_6, %c0_7], %8 {strides = array<i32>} : memref<8x128xf32, #tpu.memory_space<vmem>>, vector<8x128xf32>,
    return
  }
  func.func @transform_0(%arg0: i32, %arg1: i32) -> (i32, i32) {
    %c0_i32 = arith.constant 0 : i32
    %c0_i32_0 = arith.constant 0 : i32
    return %arg0, %c0_i32 : i32, i32
  }
  func.func @transform_1(%arg0: i32, %arg1: i32) -> (i32, i32) {
    %c0_i32 = arith.constant 0 : i32
    %c0_i32_0 = arith.constant 0 : i32
    %c0_i32_1 = arith.constant 0 : i32
    return %c0_i32, %c0_i32_0 : i32, i32
  }
  func.func @transform_2(%arg0: i32, %arg1: i32) -> (i32, i32) {
    %c0_i32 = arith.constant 0 : i32
    %c0_i32_0 = arith.constant 0 : i32
    %c0_i32_1 = arith.constant 0 : i32
    return %c0_i32, %c0_i32_0 : i32, i32
  }
  func.func @transform_3(%arg0: i32, %arg1: i32) -> (i32, i32) {
    %c0_i32 = arith.constant 0 : i32
    %c0_i32_0 = arith.constant 0 : i32
    %c0_i32_1 = arith.constant 0 : i32
    return %c0_i32, %c0_i32_0 : i32, i32
  }
  func.func @transform_4(%arg0: i32, %arg1: i32) -> (i32, i32) {
    %c0_i32 = arith.constant 0 : i32
    %c0_i32_0 = arith.constant 0 : i32
    %c0_i32_1 = arith.constant 0 : i32
    return %c0_i32, %c0_i32_0 : i32, i32
  }
  func.func @transform_5(%arg0: i32, %arg1: i32) -> (i32, i32) {
    %c0_i32 = arith.constant 0 : i32
    %c0_i32_0 = arith.constant 0 : i32
    return %c0_i32, %arg1 : i32, i32
  }
  func.func @transform_6(%arg0: i32, %arg1: i32) -> (i32, i32) {
    %c0_i32 = arith.constant 0 : i32
    %c0_i32_0 = arith.constant 0 : i32
    return %c0_i32, %arg1 : i32, i32
  }
  func.func @transform_7(%arg0: i32, %arg1: i32) -> (i32, i32) {
    %c0_i32 = arith.constant 0 : i32
    return %arg0, %arg1 : i32, i32
  }
}

</mosaic_0001>

<llo_original>
// kernel: tpu_custom_call.1
$region0: #{tpu_custom_call.1}
  #allocation0 [shape = 'u32[]', space=smem, size = 0x4, offset = 0x4, fixed_abs, tag = 'smem constant byte address 0x4 - core index']
  #allocation1 [shape = 'u32[72,128]{1,0:T(1,128)}', space=vmem, size = 0x9000, scoped, tag = 'internal scratch']
  #allocation2 [shape = 'bf16[8,128]{1,0:T(8,128)(2,1)}', space=vmem, size = 0x800, scoped, tag = 'scratch operand']
  %s0 = inlined_call_operand.vmem [shape: f32[8,1], index: 0, kind: input, shape index: {}]
  %s1 = inlined_call_operand.vmem [shape: f32[1,128], index: 1, kind: input, shape index: {}]
  %s2 = inlined_call_operand.hbm [shape: bf16[128,128], index: 2, kind: input, shape index: {}]
  %s3 = inlined_call_operand.hbm [shape: bf16[128,128], index: 3, kind: input, shape index: {}]
  %s4 = inlined_call_operand.vmem [shape: f32[1,128], index: 4, kind: input, shape index: {}]
  %s5 = inlined_call_operand.hbm [shape: bf16[128,128], index: 5, kind: input, shape index: {}]
  %s6 = inlined_call_operand.vmem [shape: f32[1,128], index: 6, kind: input, shape index: {}]
  %s7 = inlined_call_operand.hbm [shape: f32[8,128], index: 7, kind: output, shape index: {}]
  %s8 = sld [smem:[#allocation0]]
  $region54: #{tpu_custom_call.1} parent=0
    _
  %s10 = ssub.s32 1, %s8
  %s11 = scalar_select 0, %s10, %s8
  $region1: #{tpu_custom_call.1} parent=0
    #allocation3 [shape = 'u8[32768]{0}', space=vmem, size = 0x8000, scoped, tag = 'input window, operand 2, single buffered']
    #allocation4 [shape = 's32[1]{0}', space=sflag, size = 0x4, scoped, tag = 'scoped memory for tpu_custom_call.1']
    #allocation5 [shape = 's32[1]{0}', space=sflag, size = 0x4, scoped, tag = 'scoped memory for tpu_custom_call.1']
    #allocation6 [shape = 'u8[32768]{0}', space=vmem, size = 0x8000, scoped, tag = 'input window, operand 3, single buffered']
    #allocation7 [shape = 's32[1]{0}', space=sflag, size = 0x4, scoped, tag = 'scoped memory for tpu_custom_call.1']
    #allocation8 [shape = 'u8[32768]{0}', space=vmem, size = 0x8000, scoped, tag = 'input window, operand 5, single buffered']
    #allocation9 [shape = 'u8[4096]{0}', space=vmem, size = 0x1000, scoped, tag = 'output window, operand 0, single buffered']
    %12 = vsyncpa [#allocation4], 0
    %13 = vsyncpa [#allocation7], 0
    %14 = vsyncpa [#allocation5], 0
    // Predicated region
    $region2: #{tpu_custom_call.1} parent=1 // pred_check
      _
    $region3: #{tpu_custom_call.1} parent=1 // pred_check_branch
      %16 = sbr.rel (0) target = $region5
    $region4: #{tpu_custom_call.1} parent=1 // pred_region
      _
    $region5: #{tpu_custom_call.1} parent=1 // pred_fallthru
      _
    // Predicated region
    $region6: #{tpu_custom_call.1} parent=1 // pred_check
      _
    $region7: #{tpu_custom_call.1} parent=1 // pred_check_branch
      %18 = sbr.rel (0) target = $region9
    $region8: #{tpu_custom_call.1} parent=1 // pred_region
      _
    $region9: #{tpu_custom_call.1} parent=1 // pred_fallthru
      _
    // Predicated region
    $region10: #{tpu_custom_call.1} parent=1 // pred_check
      _
    $region11: #{tpu_custom_call.1} parent=1 // pred_check_branch
      %20 = sbr.rel (0) target = $region13
    $region12: #{tpu_custom_call.1} parent=1 // pred_region
      %22 = vsyncadd [#allocation4], 0
      %s23 = sshll.u32 %s2, 4
      %s24 = int_to_ptr.hbm [resolvable:$true] %s23
      %s25 = sshll.u32 [#allocation3], 4
      %s26 = int_to_ptr.vmem [resolvable:$true] %s25
      %31 = dma.hbm_to_vmem [thread:$0]  %s24, 1024, %s26, [#allocation4], 64, 64, 4
    $region13: #{tpu_custom_call.1} parent=1 // pred_fallthru
      _
    // Predicated region
    $region14: #{tpu_custom_call.1} parent=1 // pred_check
      _
    $region15: #{tpu_custom_call.1} parent=1 // pred_check_branch
      %33 = sbr.rel (0) target = $region17
    $region16: #{tpu_custom_call.1} parent=1 // pred_region
      %35 = vsyncadd [#allocation7], 0
      %s36 = sshll.u32 %s3, 4
      %s37 = int_to_ptr.hbm [resolvable:$true] %s36
      %s38 = sshll.u32 [#allocation6], 4
      %s39 = int_to_ptr.vmem [resolvable:$true] %s38
      %44 = dma.hbm_to_vmem [thread:$0]  %s37, 1024, %s39, [#allocation7], 64, 64, 4
    $region17: #{tpu_custom_call.1} parent=1 // pred_fallthru
      _
    // Predicated region
    $region18: #{tpu_custom_call.1} parent=1 // pred_check
      _
    $region19: #{tpu_custom_call.1} parent=1 // pred_check_branch
      %46 = sbr.rel (0) target = $region21
    $region20: #{tpu_custom_call.1} parent=1 // pred_region
      _
    $region21: #{tpu_custom_call.1} parent=1 // pred_fallthru
      _
    // Predicated region
    $region22: #{tpu_custom_call.1} parent=1 // pred_check
      _
    $region23: #{tpu_custom_call.1} parent=1 // pred_check_branch
      %48 = sbr.rel (0) target = $region25
    $region24: #{tpu_custom_call.1} parent=1 // pred_region
      %50 = vsyncadd [#allocation7], 0
      %s51 = sshll.u32 %s5, 4
      %s52 = int_to_ptr.hbm [resolvable:$true] %s51
      %s53 = sshll.u32 [#allocation8], 4
      %s54 = int_to_ptr.vmem [resolvable:$true] %s53
      %59 = dma.hbm_to_vmem [thread:$0]  %s52, 1024, %s54, [#allocation7], 64, 64, 4
    $region25: #{tpu_custom_call.1} parent=1 // pred_fallthru
      _
    // Predicated region
    $region26: #{tpu_custom_call.1} parent=1 // pred_check
      _
    $region27: #{tpu_custom_call.1} parent=1 // pred_check_branch
      %61 = sbr.rel (0) target = $region29
    $region28: #{tpu_custom_call.1} parent=1 // pred_region
      _
    $region29: #{tpu_custom_call.1} parent=1 // pred_fallthru
      _
    // Predicated region
    $region30: #{tpu_custom_call.1} parent=1 // pred_check
      _
    $region31: #{tpu_custom_call.1} parent=1 // pred_check_branch
      %63 = sbr.rel (0) target = $region33
    $region32: #{tpu_custom_call.1} parent=1 // pred_region
      %65 = dma.done [#allocation4], 1024
    $region33: #{tpu_custom_call.1} parent=1 // pred_fallthru
      _
    // Predicated region
    $region34: #{tpu_custom_call.1} parent=1 // pred_check
      _
    $region35: #{tpu_custom_call.1} parent=1 // pred_check_branch
      %67 = sbr.rel (0) target = $region37
    $region36: #{tpu_custom_call.1} parent=1 // pred_region
      %69 = dma.done [#allocation7], 1024
    $region37: #{tpu_custom_call.1} parent=1 // pred_fallthru
      _
    // Predicated region
    $region38: #{tpu_custom_call.1} parent=1 // pred_check
      _
    $region39: #{tpu_custom_call.1} parent=1 // pred_check_branch
      %71 = sbr.rel (0) target = $region41
    $region40: #{tpu_custom_call.1} parent=1 // pred_region
      %73 = dma.done [#allocation7], 1024
    $region41: #{tpu_custom_call.1} parent=1 // pred_fallthru
      _
    %p74 = scmp.eq.s32.totalorder 0, 0
    // Predicated region
    $region42: #{tpu_custom_call.1} parent=1 // pred_check
      %p75 = pneg %p74
    $region43: #{tpu_custom_call.1} parent=1 // pred_check_branch
      %77 = sbr.rel (%p75) target = $region45
    $region44: #{tpu_custom_call.1} parent=1 // pred_region
      %v78 = vld [vmem:[%s0] sm:$0xff]
      %v79 = vld [vmem:[%s1] sm:$0x1]
      %81 = vset.pattern.permute.xlu0 0
      %82 = vperm.xlu0 %81, %v78
      %v83 = vpop.permute.xlu0 %82
      %v86 = vperm.slane %v79, 0
      %v88 = vmul.f32 %v83, %v86
      %v89 = vand.u32 2147483647, %v88
      %vm90 = vcmp.le.f32.partialorder %v89, 0.7853982
      %vm91 = vcmp.lt.s32.totalorder %v88, 0
      %v92 = vand.u32 %v88, 2139095040
      %v93 = vshrl.u32 %v92, 23
      %v94 = vsub.s32 %v93, 127
      %v95 = vand.u32 2147483647, %v88
      %v96 = vand.u32 %v95, 8388607
      %v97 = vor.u32 %v96, 8388608
      %v98 = vsub.s32 0, %v97
      %v99 = vadd.s32 %v94, 1
      %vm100 = vcmp.gt.s32.totalorder %v99, 0
      %v101 = vsel %vm100, %v99, 0
      %v102 = vshrl.u32 %v101, 5
      %v103 = vand.u32 %v101, 31
      %v104 = vsub.s32 32, %v103
      %v105 = vshrl.u32 683565275, %v104
      %v106 = vshll.u32 683565275, %v103
      %v107 = vshrl.u32 2475754826, %v104
      %v108 = vor.u32 %v106, %v107
      %v109 = vshll.u32 2475754826, %v103
      %v110 = vshrl.u32 2131351028, %v104
      %v111 = vor.u32 %v109, %v110
      %v112 = vshll.u32 2131351028, %v103
      %v113 = vshrl.u32 2102212464, %v104
      %v114 = vor.u32 %v112, %v113
      %v115 = vshll.u32 2102212464, %v103
      %v116 = vshrl.u32 920167782, %v104
      %v117 = vor.u32 %v115, %v116
      %v118 = vshll.u32 920167782, %v103
      %v119 = vshrl.u32 1326507024, %v104
      %v120 = vor.u32 %v118, %v119
      %vm121 = vcmp.lt.s32.totalorder %v102, 1
      %vm122 = vcmp.lt.s32.totalorder %v102, 2
      %vm123 = vcmp.lt.s32.totalorder %v102, 3
      %vm124 = vcmp.lt.s32.totalorder %v102, 4
      %v125 = vsel %vm121, %v105, %v108
      %v126 = vsel %vm124, %v114, 2102212464
      %v127 = vsel %vm123, %v111, %v126
      %v128 = vsel %vm122, %v125, %v127
      %v129 = vsel %vm121, %v108, %v111
      %v130 = vsel %vm124, %v117, 920167782
      %v131 = vsel %vm123, %v114, %v130
      %v132 = vsel %vm122, %v129, %v131
      %v133 = vsel %vm121, %v111, %v114
      %v134 = vsel %vm124, %v120, 1326507024
      %v135 = vsel %vm123, %v117, %v134
      %v136 = vsel %vm122, %v133, %v135
      %v137 = vshll.u32 %v97, 8
      %v138 = vand.u32 %v137, 65535
      %v139 = vshrl.u32 %v137, 16
      %v140 = vand.u32 %v136, 65535
      %v141 = vshrl.u32 %v136, 16
      %v142 = vmul.u32 %v138, %v140
      %v143 = vmul.u32 %v138, %v141
      %v144 = vmul.u32 %v139, %v140
      %v145 = vmul.u32 %v139, %v141
      %v146 = vshll.u32 %v143, 16
      %v147 = vshrl.u32 %v143, 16
      %v148 = vshll.u32 %v144, 16
      %v149 = vshrl.u32 %v144, 16
      %vm150 = vc.u32 %v142, %v146
      %v151 = vsel %vm150, 1, 0
      %v152 = vadd.s32 %v142, %v146
      %v153 = vadd.s32 %v145, %v151
      %vm154 = vc.u32 %v152, %v148
      %v155 = vsel %vm154, 1, 0
      %v156 = vadd.s32 %v152, %v148
      %v157 = vadd.s32 %v153, %v155
      %v158 = vadd.s32 %v157, %v147
      %v159 = vadd.s32 %v158, %v149
      %v160 = vand.u32 %v137, 65535
      %v161 = vshrl.u32 %v137, 16
      %v162 = vand.u32 %v132, 65535
      %v163 = vshrl.u32 %v132, 16
      %v164 = vmul.u32 %v160, %v162
      %v165 = vmul.u32 %v160, %v163
      %v166 = vmul.u32 %v161, %v162
      %v167 = vmul.u32 %v161, %v163
      %v168 = vshll.u32 %v165, 16
      %v169 = vshrl.u32 %v165, 16
      %v170 = vshll.u32 %v166, 16
      %v171 = vshrl.u32 %v166, 16
      %vm172 = vc.u32 %v164, %v168
      %v173 = vsel %vm172, 1, 0
      %v174 = vadd.s32 %v164, %v168
      %v175 = vadd.s32 %v167, %v173
      %vm176 = vc.u32 %v174, %v170
      %v177 = vsel %vm176, 1, 0
      %v178 = vadd.s32 %v174, %v170
      %v179 = vadd.s32 %v175, %v177
      %v180 = vadd.s32 %v179, %v169
      %v181 = vadd.s32 %v180, %v171
      %v182 = vmul.u32 %v137, %v128
      %v183 = vadd.s32 %v159, %v178
      %vm184 = vc.u32 %v159, %v178
      %v185 = vadd.s32 %v181, 1
      %v186 = vsel %vm184, %v185, %v181
      %v187 = vadd.s32 %v182, %v186
      %v188 = vadd.s32 %v187, 536870912
      %v189 = vshrl.u32 %v188, 30
      %v190 = vshll.u32 %v189, 30
      %v191 = vsub.s32 %v187, %v190
      %vm192 = vcmp.lt.s32.totalorder %v191, 0
      %v193 = vsub.s32 0, %v191
      %v194 = vsel %vm192, %v193, %v191
      %v195 = vclz %v194
      %v196 = vsub.s32 %v195, 2
      %vm197 = vcmp.gt.s32.totalorder 0, %v196
      %v198 = vsel %vm197, 0, %v196
      %v199 = vsub.s32 32, %v198
      %v200 = vshll.u32 %v191, %v198
      %v201 = vshrl.u32 %v183, %v199
      %v202 = vor.u32 %v200, %v201
      %v203 = vsub.s32 4294967266, %v198
      %v204 = vadd.s32 %v203, 127
      %v205 = vshll.u32 %v204, 23
      %v206 = vor.u32 4788187, %v205
      %v207 = vand.u32 2147483647, %v206
      %v209 = vcvt.s32.f32 %v202
      %v210 = vmul.f32 %v209, %v207
      %v211 = vxor.u32 %v210, 2147483648
      %v212 = vsel %vm91, %v211, %v210
      %v213 = vsub.s32 4, %v189
      %v214 = vsel %vm91, %v213, %v189
      %v215 = vsel %vm90, %v88, %v212
      %v216 = vsel %vm90, 0, %v214
      %v217 = vmul.f32 %v215, %v215
      %v218 = vmul.f32 %v217, -0.001358992
      %v219 = vadd.f32 %v218, 0.041655596
      %v220 = vmul.f32 %v217, %v219
      %v221 = vadd.f32 %v220, -0.4999988
      %v222 = vmul.f32 %v217, %v221
      %v223 = vadd.f32 1.0, %v222
      %v224 = vmul.f32 %v215, %v215
      %v225 = vmul.f32 %v224, -0.00019511016
      %v226 = vadd.f32 %v225, 0.008332121
      %v227 = vmul.f32 %v224, %v226
      %v228 = vadd.f32 %v227, -0.16666654
      %v229 = vmul.f32 %v224, %v228
      %v230 = vadd.f32 %v229, 1.0
      %v231 = vmul.f32 %v230, %v215
      %vm232 = vweird.f32 %v88
      %v233 = vand.u32 %v216, 3
      %vm234 = vcmp.lt.s32.totalorder %v233, 2
      %vm235 = vcmp.eq.s32.totalorder %v233, 0
      %v236 = vxor.u32 %v231, 2147483648
      %v237 = vsel %vm235, %v223, %v236
      %vm238 = vcmp.eq.s32.totalorder %v233, 2
      %v239 = vxor.u32 %v223, 2147483648
      %v240 = vsel %vm238, %v239, %v231
      %v241 = vsel %vm234, %v237, %v240
      %v242 = vsel %vm232, nan, %v241
      %v243 = vpack.c.bf16 %v242, %v242
      %v244 = vand.u32 2147483647, %v88
      %vm245 = vcmp.le.f32.partialorder %v244, 0.7853982
      %vm246 = vcmp.lt.s32.totalorder %v88, 0
      %v247 = vand.u32 %v88, 2139095040
      %v248 = vshrl.u32 %v247, 23
      %v249 = vsub.s32 %v248, 127
      %v250 = vand.u32 2147483647, %v88
      %v251 = vand.u32 %v250, 8388607
      %v252 = vor.u32 %v251, 8388608
      %v253 = vsub.s32 0, %v252
      %v254 = vadd.s32 %v249, 1
      %vm255 = vcmp.gt.s32.totalorder %v254, 0
      %v256 = vsel %vm255, %v254, 0
      %v257 = vshrl.u32 %v256, 5
      %v258 = vand.u32 %v256, 31
      %v259 = vsub.s32 32, %v258
      %v260 = vshrl.u32 683565275, %v259
      %v261 = vshll.u32 683565275, %v258
      %v262 = vshrl.u32 2475754826, %v259
      %v263 = vor.u32 %v261, %v262
      %v264 = vshll.u32 2475754826, %v258
      %v265 = vshrl.u32 2131351028, %v259
      %v266 = vor.u32 %v264, %v265
      %v267 = vshll.u32 2131351028, %v258
      %v268 = vshrl.u32 2102212464, %v259
      %v269 = vor.u32 %v267, %v268
      %v270 = vshll.u32 2102212464, %v258
      %v271 = vshrl.u32 920167782, %v259
      %v272 = vor.u32 %v270, %v271
      %v273 = vshll.u32 920167782, %v258
      %v274 = vshrl.u32 1326507024, %v259
      %v275 = vor.u32 %v273, %v274
      %vm276 = vcmp.lt.s32.totalorder %v257, 1
      %vm277 = vcmp.lt.s32.totalorder %v257, 2
      %vm278 = vcmp.lt.s32.totalorder %v257, 3
      %vm279 = vcmp.lt.s32.totalorder %v257, 4
      %v280 = vsel %vm276, %v260, %v263
      %v281 = vsel %vm279, %v269, 2102212464
      %v282 = vsel %vm278, %v266, %v281
      %v283 = vsel %vm277, %v280, %v282
      %v284 = vsel %vm276, %v263, %v266
      %v285 = vsel %vm279, %v272, 920167782
      %v286 = vsel %vm278, %v269, %v285
      %v287 = vsel %vm277, %v284, %v286
      %v288 = vsel %vm276, %v266, %v269
      %v289 = vsel %vm279, %v275, 1326507024
      %v290 = vsel %vm278, %v272, %v289
      %v291 = vsel %vm277, %v288, %v290
      %v292 = vshll.u32 %v252, 8
      %v293 = vand.u32 %v292, 65535
      %v294 = vshrl.u32 %v292, 16
      %v295 = vand.u32 %v291, 65535
      %v296 = vshrl.u32 %v291, 16
      %v297 = vmul.u32 %v293, %v295
      %v298 = vmul.u32 %v293, %v296
      %v299 = vmul.u32 %v294, %v295
      %v300 = vmul.u32 %v294, %v296
      %v301 = vshll.u32 %v298, 16
      %v302 = vshrl.u32 %v298, 16
      %v303 = vshll.u32 %v299, 16
      %v304 = vshrl.u32 %v299, 16
      %vm305 = vc.u32 %v297, %v301
      %v306 = vsel %vm305, 1, 0
      %v307 = vadd.s32 %v297, %v301
      %v308 = vadd.s32 %v300, %v306
      %vm309 = vc.u32 %v307, %v303
      %v310 = vsel %vm309, 1, 0
      %v311 = vadd.s32 %v307, %v303
      %v312 = vadd.s32 %v308, %v310
      %v313 = vadd.s32 %v312, %v302
      %v314 = vadd.s32 %v313, %v304
      %v315 = vand.u32 %v292, 65535
      %v316 = vshrl.u32 %v292, 16
      %v317 = vand.u32 %v287, 65535
      %v318 = vshrl.u32 %v287, 16
      %v319 = vmul.u32 %v315, %v317
      %v320 = vmul.u32 %v315, %v318
      %v321 = vmul.u32 %v316, %v317
      %v322 = vmul.u32 %v316, %v318
      %v323 = vshll.u32 %v320, 16
      %v324 = vshrl.u32 %v320, 16
      %v325 = vshll.u32 %v321, 16
      %v326 = vshrl.u32 %v321, 16
      %vm327 = vc.u32 %v319, %v323
      %v328 = vsel %vm327, 1, 0
      %v329 = vadd.s32 %v319, %v323
      %v330 = vadd.s32 %v322, %v328
      %vm331 = vc.u32 %v329, %v325
      %v332 = vsel %vm331, 1, 0
      %v333 = vadd.s32 %v329, %v325
      %v334 = vadd.s32 %v330, %v332
      %v335 = vadd.s32 %v334, %v324
      %v336 = vadd.s32 %v335, %v326
      %v337 = vmul.u32 %v292, %v283
      %v338 = vadd.s32 %v314, %v333
      %vm339 = vc.u32 %v314, %v333
      %v340 = vadd.s32 %v336, 1
      %v341 = vsel %vm339, %v340, %v336
      %v342 = vadd.s32 %v337, %v341
      %v343 = vadd.s32 %v342, 536870912
      %v344 = vshrl.u32 %v343, 30
      %v345 = vshll.u32 %v344, 30
      %v346 = vsub.s32 %v342, %v345
      %vm347 = vcmp.lt.s32.totalorder %v346, 0
      %v348 = vsub.s32 0, %v346
      %v349 = vsel %vm347, %v348, %v346
      %v350 = vclz %v349
      %v351 = vsub.s32 %v350, 2
      %vm352 = vcmp.gt.s32.totalorder 0, %v351
      %v353 = vsel %vm352, 0, %v351
      %v354 = vsub.s32 32, %v353
      %v355 = vshll.u32 %v346, %v353
      %v356 = vshrl.u32 %v338, %v354
      %v357 = vor.u32 %v355, %v356
      %v358 = vsub.s32 4294967266, %v353
      %v359 = vadd.s32 %v358, 127
      %v360 = vshll.u32 %v359, 23
      %v361 = vor.u32 4788187, %v360
      %v362 = vand.u32 2147483647, %v361
      %v364 = vcvt.s32.f32 %v357
      %v365 = vmul.f32 %v364, %v362
      %v366 = vxor.u32 %v365, 2147483648
      %v367 = vsel %vm246, %v366, %v365
      %v368 = vsub.s32 4, %v344
      %v369 = vsel %vm246, %v368, %v344
      %v370 = vsel %vm245, %v88, %v367
      %v371 = vsel %vm245, 0, %v369
      %v372 = vmul.f32 %v370, %v370
      %v373 = vmul.f32 %v372, -0.001358992
      %v374 = vadd.f32 %v373, 0.041655596
      %v375 = vmul.f32 %v372, %v374
      %v376 = vadd.f32 %v375, -0.4999988
      %v377 = vmul.f32 %v372, %v376
      %v378 = vadd.f32 1.0, %v377
      %v379 = vmul.f32 %v370, %v370
      %v380 = vmul.f32 %v379, -0.00019511016
      %v381 = vadd.f32 %v380, 0.008332121
      %v382 = vmul.f32 %v379, %v381
      %v383 = vadd.f32 %v382, -0.16666654
      %v384 = vmul.f32 %v379, %v383
      %v385 = vadd.f32 %v384, 1.0
      %v386 = vmul.f32 %v385, %v370
      %vm387 = vweird.f32 %v88
      %v388 = vadd.s32 %v371, 3
      %v389 = vand.u32 %v388, 3
      %vm390 = vcmp.lt.s32.totalorder %v389, 2
      %vm391 = vcmp.eq.s32.totalorder %v389, 0
      %v392 = vxor.u32 %v386, 2147483648
      %v393 = vsel %vm391, %v378, %v392
      %vm394 = vcmp.eq.s32.totalorder %v389, 2
      %v395 = vxor.u32 %v378, 2147483648
      %v396 = vsel %vm394, %v395, %v386
      %v397 = vsel %vm390, %v393, %v396
      %v398 = vsel %vm387, nan, %v397
      %v399 = vpack.c.bf16 %v398, %v398
      %v400 = vld [vmem:[#allocation3] sm:$0xf]
      %v401 = vld [vmem:[#allocation3 + $0x4] sm:$0xf]
      %v402 = vld [vmem:[#allocation3 + $0x8] sm:$0xf]
      %v403 = vld [vmem:[#allocation3 + $0xc] sm:$0xf]
      %v404 = vld [vmem:[#allocation3 + $0x10] sm:$0xf]
      %v405 = vld [vmem:[#allocation3 + $0x14] sm:$0xf]
      %v406 = vld [vmem:[#allocation3 + $0x18] sm:$0xf]
      %v407 = vld [vmem:[#allocation3 + $0x1c] sm:$0xf]
      %v408 = vld [vmem:[#allocation3 + $0x20] sm:$0xf]
      %v409 = vld [vmem:[#allocation3 + $0x24] sm:$0xf]
      %v410 = vld [vmem:[#allocation3 + $0x28] sm:$0xf]
      %v411 = vld [vmem:[#allocation3 + $0x2c] sm:$0xf]
      %v412 = vld [vmem:[#allocation3 + $0x30] sm:$0xf]
      %v413 = vld [vmem:[#allocation3 + $0x34] sm:$0xf]
      %v414 = vld [vmem:[#allocation3 + $0x38] sm:$0xf]
      %v415 = vld [vmem:[#allocation3 + $0x3c] sm:$0xf]
      %v416 = vld [vmem:[#allocation6] sm:$0xf]
      %v417 = vld [vmem:[#allocation6 + $0x4] sm:$0xf]
      %v418 = vld [vmem:[#allocation6 + $0x8] sm:$0xf]
      %v419 = vld [vmem:[#allocation6 + $0xc] sm:$0xf]
      %v420 = vld [vmem:[#allocation6 + $0x10] sm:$0xf]
      %v421 = vld [vmem:[#allocation6 + $0x14] sm:$0xf]
      %v422 = vld [vmem:[#allocation6 + $0x18] sm:$0xf]
      %v423 = vld [vmem:[#allocation6 + $0x1c] sm:$0xf]
      %v424 = vld [vmem:[#allocation6 + $0x20] sm:$0xf]
      %v425 = vld [vmem:[#allocation6 + $0x24] sm:$0xf]
      %v426 = vld [vmem:[#allocation6 + $0x28] sm:$0xf]
      %v427 = vld [vmem:[#allocation6 + $0x2c] sm:$0xf]
      %v428 = vld [vmem:[#allocation6 + $0x30] sm:$0xf]
      %v429 = vld [vmem:[#allocation6 + $0x34] sm:$0xf]
      %v430 = vld [vmem:[#allocation6 + $0x38] sm:$0xf]
      %v431 = vld [vmem:[#allocation6 + $0x3c] sm:$0xf]
      %v448 = vunpack.c.l.b16 %v416
      %v449 = vunpack.c.l.b16 %v417
      %v450 = vunpack.c.l.b16 %v418
      %v451 = vunpack.c.l.b16 %v419
      %v452 = vunpack.c.l.b16 %v420
      %v453 = vunpack.c.l.b16 %v421
      %v454 = vunpack.c.l.b16 %v422
      %v455 = vunpack.c.l.b16 %v423
      %v456 = vunpack.c.l.b16 %v424
      %v457 = vunpack.c.l.b16 %v425
      %v458 = vunpack.c.l.b16 %v426
      %v459 = vunpack.c.l.b16 %v427
      %v460 = vunpack.c.l.b16 %v428
      %v461 = vunpack.c.l.b16 %v429
      %v462 = vunpack.c.l.b16 %v430
      %v463 = vunpack.c.l.b16 %v431
      %v464 = vpack.c.b16 %v449, %v448
      %v465 = vpack.c.b16 %v451, %v450
      %v466 = vpack.c.b16 %v453, %v452
      %v467 = vpack.c.b16 %v455, %v454
      %v468 = vpack.c.b16 %v457, %v456
      %v469 = vpack.c.b16 %v459, %v458
      %v470 = vpack.c.b16 %v461, %v460
      %v471 = vpack.c.b16 %v463, %v462
      %480 = vmatpush.bf16.msra.mxu0 %v471
      %481 = vmatpush.bf16.msra.mxu0 %v470
      %482 = vmatpush.bf16.msra.mxu0 %v469
      %483 = vmatpush.bf16.msra.mxu0 %v468
      %484 = vmatpush.bf16.msra.mxu0 %v467
      %485 = vmatpush.bf16.msra.mxu0 %v466
      %486 = vmatpush.bf16.msra.mxu0 %v465
      %487 = vmatpush.bf16.msra.mxu0 %v464
      %488 = vmatmul.bf16.gmra.mxu0 %v399
      %v489 = vpop.f32.mrf.mxu0
      %v490 = vadd.f32 0.0, %v489
      %v491 = vpop.f32.mrf.mxu0
      %492 = vdwg.mxu0
      %v509 = vunpack.c.l.b16 %v400
      %v510 = vunpack.c.l.b16 %v401
      %v511 = vunpack.c.l.b16 %v402
      %v512 = vunpack.c.l.b16 %v403
      %v513 = vunpack.c.l.b16 %v404
      %v514 = vunpack.c.l.b16 %v405
      %v515 = vunpack.c.l.b16 %v406
      %v516 = vunpack.c.l.b16 %v407
      %v517 = vunpack.c.l.b16 %v408
      %v518 = vunpack.c.l.b16 %v409
      %v519 = vunpack.c.l.b16 %v410
      %v520 = vunpack.c.l.b16 %v411
      %v521 = vunpack.c.l.b16 %v412
      %v522 = vunpack.c.l.b16 %v413
      %v523 = vunpack.c.l.b16 %v414
      %v524 = vunpack.c.l.b16 %v415
      %v525 = vpack.c.b16 %v510, %v509
      %v526 = vpack.c.b16 %v512, %v511
      %v527 = vpack.c.b16 %v514, %v513
      %v528 = vpack.c.b16 %v516, %v515
      %v529 = vpack.c.b16 %v518, %v517
      %v530 = vpack.c.b16 %v520, %v519
      %v531 = vpack.c.b16 %v522, %v521
      %v532 = vpack.c.b16 %v524, %v523
      %541 = vmatpush.bf16.msra.mxu0 %v532
      %542 = vmatpush.bf16.msra.mxu0 %v531
      %543 = vmatpush.bf16.msra.mxu0 %v530
      %544 = vmatpush.bf16.msra.mxu0 %v529
      %545 = vmatpush.bf16.msra.mxu0 %v528
      %546 = vmatpush.bf16.msra.mxu0 %v527
      %547 = vmatpush.bf16.msra.mxu0 %v526
      %548 = vmatpush.bf16.msra.mxu0 %v525
      %549 = vmatmul.bf16.gmra.mxu0 %v243
      %v550 = vpop.f32.mrf.mxu0
      %v551 = vadd.f32 %v490, %v550
      %v552 = vpop.f32.mrf.mxu0
      %553 = vdwg.mxu0
      %v554 = vld [vmem:[%s4] sm:$0x1]
      %v556 = vperm.slane %v554, 0
      %v558 = vadd.f32 %v551, %v556
      %v559 = vxor.u32 %v558, 2147483648
      %v560 = vmul.f32 %v559, 1.442695
      %v561 = vpow.pop %v560
      %v562 = vadd.f32 %v561, 1.0
      %v563 = vrcp.pop %v562
      %v564 = vmul.f32 %v562, %v563
      %v565 = vsub.f32 1.0, %v564
      %v566 = vmul.f32 %v563, %v565
      %v567 = vadd.f32 %v563, %v566
      %vm568 = vweird.f32 %v562
      %vm569 = vweird.f32 %v563
      %vm570 = vmor %vm568, %vm569
      %v571 = vsel %vm570, %v563, %v567
      %v572 = vand.u32 2147483647, %v562
      %vm573 = vcmp.eq.f32.partialorder %v572, 8.507059e+37
      %v574 = vand.u32 %v562, 2147483648
      %v575 = vor.u32 1.1754944e-38, %v574
      %v576 = vsel %vm573, %v575, %v571
      %v577 = vmul.f32 1.0, %v576
      %v578 = vmul.f32 %v558, %v577
      %v579 = vpack.c.bf16 %v578, %v578
      %580 = vst [vmem:[#allocation2] sm:$0xf] %v579
    $region45: #{tpu_custom_call.1} parent=1 // pred_fallthru
      _
    %v581 = vld [vmem:[#allocation2] sm:$0xf]
    %v582 = vld [vmem:[#allocation8] sm:$0xf]
    %v583 = vld [vmem:[#allocation8 + $0x4] sm:$0xf]
    %v584 = vld [vmem:[#allocation8 + $0x8] sm:$0xf]
    %v585 = vld [vmem:[#allocation8 + $0xc] sm:$0xf]
    %v586 = vld [vmem:[#allocation8 + $0x10] sm:$0xf]
    %v587 = vld [vmem:[#allocation8 + $0x14] sm:$0xf]
    %v588 = vld [vmem:[#allocation8 + $0x18] sm:$0xf]
    %v589 = vld [vmem:[#allocation8 + $0x1c] sm:$0xf]
    %v590 = vld [vmem:[#allocation8 + $0x20] sm:$0xf]
    %v591 = vld [vmem:[#allocation8 + $0x24] sm:$0xf]
    %v592 = vld [vmem:[#allocation8 + $0x28] sm:$0xf]
    %v593 = vld [vmem:[#allocation8 + $0x2c] sm:$0xf]
    %v594 = vld [vmem:[#allocation8 + $0x30] sm:$0xf]
    %v595 = vld [vmem:[#allocation8 + $0x34] sm:$0xf]
    %v596 = vld [vmem:[#allocation8 + $0x38] sm:$0xf]
    %v597 = vld [vmem:[#allocation8 + $0x3c] sm:$0xf]
    %v598 = vld [vmem:[%s6] sm:$0x1]
    %v600 = vperm.slane %v598, 0
    %v618 = vunpack.c.l.b16 %v582
    %v619 = vunpack.c.l.b16 %v583
    %v620 = vunpack.c.l.b16 %v584
    %v621 = vunpack.c.l.b16 %v585
    %v622 = vunpack.c.l.b16 %v586
    %v623 = vunpack.c.l.b16 %v587
    %v624 = vunpack.c.l.b16 %v588
    %v625 = vunpack.c.l.b16 %v589
    %v626 = vunpack.c.l.b16 %v590
    %v627 = vunpack.c.l.b16 %v591
    %v628 = vunpack.c.l.b16 %v592
    %v629 = vunpack.c.l.b16 %v593
    %v630 = vunpack.c.l.b16 %v594
    %v631 = vunpack.c.l.b16 %v595
    %v632 = vunpack.c.l.b16 %v596
    %v633 = vunpack.c.l.b16 %v597
    %v634 = vpack.c.b16 %v619, %v618
    %v635 = vpack.c.b16 %v621, %v620
    %v636 = vpack.c.b16 %v623, %v622
    %v637 = vpack.c.b16 %v625, %v624
    %v638 = vpack.c.b16 %v627, %v626
    %v639 = vpack.c.b16 %v629, %v628
    %v640 = vpack.c.b16 %v631, %v630
    %v641 = vpack.c.b16 %v633, %v632
    %650 = vmatpush.bf16.msra.mxu0 %v641
    %651 = vmatpush.bf16.msra.mxu0 %v640
    %652 = vmatpush.bf16.msra.mxu0 %v639
    %653 = vmatpush.bf16.msra.mxu0 %v638
    %654 = vmatpush.bf16.msra.mxu0 %v637
    %655 = vmatpush.bf16.msra.mxu0 %v636
    %656 = vmatpush.bf16.msra.mxu0 %v635
    %657 = vmatpush.bf16.msra.mxu0 %v634
    %658 = vmatmul.bf16.gmra.mxu0 %v581
    %v659 = vpop.f32.mrf.mxu0
    %v660 = vadd.f32 %v600, %v659
    %v661 = vpop.f32.mrf.mxu0
    %662 = vdwg.mxu0
    %663 = vst [vmem:[#allocation9] sm:$0xff] %v660
    // Predicated region
    $region46: #{tpu_custom_call.1} parent=1 // pred_check
      _
    $region47: #{tpu_custom_call.1} parent=1 // pred_check_branch
      %665 = sbr.rel (0) target = $region49
    $region48: #{tpu_custom_call.1} parent=1 // pred_region
      %667 = vsyncadd [#allocation5], 0
      %s669 = sshll.u32 [#allocation9], 4
      %s670 = int_to_ptr.vmem [resolvable:$true] %s669
      %s671 = sshll.u32 %s7, 4
      %s672 = int_to_ptr.hbm [resolvable:$true] %s671
      %674 = dma.vmem_to_hbm [thread:$0]  %s670, 128, %s672, [#allocation5]
    $region49: #{tpu_custom_call.1} parent=1 // pred_fallthru
      _
    // Predicated region
    $region50: #{tpu_custom_call.1} parent=1 // pred_check
      _
    $region51: #{tpu_custom_call.1} parent=1 // pred_check_branch
      %676 = sbr.rel (0) target = $region53
    $region52: #{tpu_custom_call.1} parent=1 // pred_region
      %678 = dma.done [#allocation5], 128
    $region53: #{tpu_custom_call.1} parent=1 // pred_fallthru
      _
    %679 = vsyncpa [#allocation4], 1
    %680 = vsyncpa [#allocation7], 1
    %681 = vsyncpa [#allocation5], 1

</llo_original>
